<compile_context>
chip_gen: v7x
topology: tpu7x:2x2x1
jax: 0.10.0
libtpu: 0.0.40
codegen_flags: <defaults>
</compile_context>

<pallas_src>
import functools

import jax
import jax.numpy as jnp
from jax import lax
from jax.experimental import pallas as pl
from jax.experimental.pallas import tpu as pltpu

D_IN, D_H1, D_H2, D_TEMP, D_TIME = 6, 24, 48, 4, 5
D_OUT = D_TEMP + D_TIME            # 9 = temp ++ time
BN_EPS = 1e-5

SUB = 256                          # inner sub-tile width (lanes) -- keeps h1/h2 in vregs
MAX_BLOCK_B = 32768                # outer block cap: ~38 MiB double-buffered VMEM

# VMEM bytes per batch row, double-buffered:
#   x block   (block_b, 6) f32 -> lane-padded to 128 lanes  : 512 B/row
#   out block (9, block_b) f32 -> sublane-padded to 16 rows :  64 B/row
_VMEM_BYTES_PER_ROW = 2 * (512 + 64)


def _cdiv(a, b):
    return -(-a // b)


def _round_up(a, b):
    return _cdiv(a, b) * b


# ----------------------------------------------------------------------------
# Kernel
# ----------------------------------------------------------------------------
def _ann_kernel(x_ref, w1_ref, c1_ref, w2_ref, c2_ref, wo_ref, bo_ref, out_ref):
    """Fused MLP on one batch block.

    x_ref  : (block_b, 6)  batch-major input block (natural layout, no host transpose)
    w1_ref : (24, 6),  c1_ref : (24, 1)   -- linear1 with BN1 folded in
    w2_ref : (48, 24), c2_ref : (48, 1)   -- linear2 with BN2 folded in
    wo_ref : (9, 48),  bo_ref : (9, 1)    -- temp/time heads concatenated
    out_ref: (9, block_b)  feature-major output block (batch on the lane axis)
    """
    block_b = x_ref.shape[0]
    n_inner = block_b // SUB

    def body(s, carry):
        r0 = pl.multiple_of(s * SUB, SUB)                    # 256-aligned offset
        xs = x_ref[pl.ds(r0, SUB), :]                        # (SUB, 6) batch-major

        # Layer 1: contract the size-6 feature axis of BOTH operands so the
        # result is feature-major (24, SUB) with batch on the lane axis.
        h1 = lax.dot_general(w1_ref[...], xs, (((1,), (1,)), ((), ())),
                             preferred_element_type=jnp.float32)
        h1 = jnp.maximum(h1 + c1_ref[...], 0.0)              # (24, SUB)

        h2 = jnp.dot(w2_ref[...], h1, preferred_element_type=jnp.float32)
        h2 = jnp.maximum(h2 + c2_ref[...], 0.0)              # (48, SUB)

        out = jnp.dot(wo_ref[...], h2, preferred_element_type=jnp.float32)
        out = out + bo_ref[...]                              # (9, SUB)
        out_ref[:, pl.ds(r0, SUB)] = out.astype(out_ref.dtype)
        return carry

    # Sub-tiling keeps h1/h2 in vregs (no VMEM round trip).  Only fully unroll
    # short loops so large blocks don't blow up code size / compile time.
    lax.fori_loop(0, n_inner, body, 0, unroll=(n_inner <= 8))


# ----------------------------------------------------------------------------
# Tiling / wrapper
# ----------------------------------------------------------------------------
def _num_tensorcores_per_device():
    """Best effort: 2 for megacore chips (v4 / v5p / v7x), else 1."""
    try:
        kind = jax.devices()[0].device_kind.lower()
    except Exception:
        return 1
    return 2 if any(tag in kind for tag in ("v7", "7x", "v4", "v5p")) else 1


def _choose_tiling(B, max_block_b, n_cores):
    """Pick (block_b, n_steps): big adaptive blocks to amortize the per-step
    cost, no forced extra steps on 1-TC chips, even >=2*n_cores steps on
    megacore chips when there is more than one step anyway."""
    max_block_b = max(SUB, (max_block_b // SUB) * SUB)
    target = min(max_block_b, _round_up(B, SUB))
    n_steps = _cdiv(B, target)
    if n_cores > 1 and n_steps > 1:
        n_steps = _round_up(max(n_steps, 2 * n_cores), n_cores)
    block_b = _round_up(_cdiv(B, n_steps), SUB)
    n_steps = _cdiv(B, block_b)          # grid must cover B
    return block_b, n_steps


@functools.partial(jax.jit, static_argnames=("max_block_b", "transpose_out"))
def ann_forward(x, kparams, *, max_block_b=MAX_BLOCK_B, transpose_out=True):
    """Fused ANN_model forward (eval mode).

    x       : (B, 6) float32, natural batch-major layout (no host-side padding).
    kparams : kernel-ready params from fold_params().
    Returns (temp, time) = (B, 4), (B, 5) when transpose_out=True (module
    semantics); with transpose_out=False returns the feature-major slabs
    (4, B), (5, B) and skips the output transpose pass.
    """
    B = x.shape[0]
    n_cores = _num_tensorcores_per_device()
    block_b, n_steps = _choose_tiling(B, max_block_b, n_cores)
    assert block_b % 128 == 0 and block_b % SUB == 0, block_b

    # Explicit VMEM budget for the chosen block (stay under v7x's 64 MiB).
    vmem_limit = block_b * _VMEM_BYTES_PER_ROW + (4 << 20)
    vmem_limit = int(min(max(vmem_limit, 16 << 20), 48 << 20))

    param_elems = D_IN * D_H1 + D_H1 * D_H2 + D_H2 * D_OUT + D_H1 + D_H2 + D_OUT
    cost = pl.CostEstimate(
        flops=2 * B * (D_IN * D_H1 + D_H1 * D_H2 + D_H2 * D_OUT),
        transcendentals=0,
        bytes_accessed=4 * B * (D_IN + D_OUT) + 4 * param_elems,
    )

    def rep(shape):   # small replicated operand (weights / bias), VMEM resident
        return pl.BlockSpec(shape, lambda i: (0,) * len(shape))

    out_fm = pl.pallas_call(
        _ann_kernel,
        grid=(n_steps,),
        in_specs=[
            pl.BlockSpec((block_b, D_IN), lambda i: (i, 0)),   # x, batch-major
            rep((D_H1, D_IN)), rep((D_H1, 1)),                 # layer 1 (BN folded)
            rep((D_H2, D_H1)), rep((D_H2, 1)),                 # layer 2 (BN folded)
            rep((D_OUT, D_H2)), rep((D_OUT, 1)),               # merged output heads
        ],
        out_specs=pl.BlockSpec((D_OUT, block_b), lambda i: (0, i)),  # lane-dense
        out_shape=jax.ShapeDtypeStruct((D_OUT, B), jnp.float32),
        compiler_params=pltpu.CompilerParams(
            dimension_semantics=("parallel",),
            vmem_limit_bytes=vmem_limit),
        cost_estimate=cost,
    )(x,
      kparams["w1T"], kparams["c1"],
      kparams["w2T"], kparams["c2"],
      kparams["woT"], kparams["bo"])

    temp_fm, time_fm = out_fm[:D_TEMP], out_fm[D_TEMP:]
    if transpose_out:
        return temp_fm.T, time_fm.T        # (B, 4), (B, 5): module semantics
    return temp_fm, time_fm                # (4, B), (5, B): no extra HBM pass


# ----------------------------------------------------------------------------
# Parameter construction (PyTorch-equivalent) + host-side folding
# ----------------------------------------------------------------------------
def init_raw_params(key):
    """PyTorch-style params: linear weights stored as (in, out); BN eval stats."""
    keys = jax.random.split(key, 12)

    def linear(kw, kb, fan_in, fan_out):
        bound = 1.0 / jnp.sqrt(fan_in)
        w = jax.random.uniform(kw, (fan_in, fan_out), jnp.float32, -bound, bound)
        b = jax.random.uniform(kb, (1, fan_out), jnp.float32, -bound, bound)
        return w, b

    w1, b1 = linear(keys[0], keys[1], D_IN, D_H1)
    w2, b2 = linear(keys[2], keys[3], D_H1, D_H2)
    wt, bt = linear(keys[4], keys[5], D_H2, D_TEMP)
    wm, bm = linear(keys[6], keys[7], D_H2, D_TIME)

    def bn(kg, km, n):
        gamma = 0.5 + jax.random.uniform(kg, (1, n), jnp.float32)      # > 0
        beta = 0.1 * jax.random.normal(km, (1, n), jnp.float32)
        mean = 0.1 * jax.random.normal(jax.random.fold_in(km, 1), (1, n), jnp.float32)
        var = 0.5 + jax.random.uniform(jax.random.fold_in(kg, 1), (1, n), jnp.float32)
        return gamma, beta, mean, var

    g1, be1, m1, v1 = bn(keys[8], keys[9], D_H1)
    g2, be2, m2, v2 = bn(keys[10], keys[11], D_H2)

    return dict(w1=w1, b1=b1, w2=w2, b2=b2, wt=wt, bt=bt, wm=wm, bm=bm,
                bn1_gamma=g1, bn1_beta=be1, bn1_mean=m1, bn1_var=v1,
                bn2_gamma=g2, bn2_beta=be2, bn2_mean=m2, bn2_var=v2)


def fold_params(p):
    """Fold eval-mode BN into weights/bias, merge output heads, transpose to
    the feature-major layout the kernel expects."""
    # TODO(synk): training-mode BatchNorm (batch statistics + running-stat
    # updates) is not implemented; eval-mode BN is folded into the linears.
    s1 = p["bn1_gamma"] / jnp.sqrt(p["bn1_var"] + BN_EPS)
    t1 = p["bn1_beta"] - p["bn1_mean"] * s1
    s2 = p["bn2_gamma"] / jnp.sqrt(p["bn2_var"] + BN_EPS)
    t2 = p["bn2_beta"] - p["bn2_mean"] * s2

    w1f = p["w1"] * s1                      # (6, 24)
    c1 = p["b1"] * s1 + t1                  # (1, 24)
    w2f = p["w2"] * s2                      # (24, 48)
    c2 = p["b2"] * s2 + t2                  # (1, 48)

    wo = jnp.concatenate([p["wt"], p["wm"]], axis=1)   # (48, 9)
    bo = jnp.concatenate([p["bt"], p["bm"]], axis=1)   # (1, 9)

    return dict(
        w1T=w1f.T, c1=c1.T,                 # (24, 6),  (24, 1)
        w2T=w2f.T, c2=c2.T,                 # (48, 24), (48, 1)
        woT=wo.T, bo=bo.T,                  # (9, 48),  (9, 1)
    )


def reference_forward(x, p):
    """Pure-JAX reference matching the PyTorch module in eval mode."""
    def bn(h, gamma, beta, mean, var):
        return (h - mean) / jnp.sqrt(var + BN_EPS) * gamma + beta

    h1 = jnp.maximum(bn(x @ p["w1"] + p["b1"],
                        p["bn1_gamma"], p["bn1_beta"], p["bn1_mean"], p["bn1_var"]), 0.0)
    h2 = jnp.maximum(bn(h1 @ p["w2"] + p["b2"],
                        p["bn2_gamma"], p["bn2_beta"], p["bn2_mean"], p["bn2_var"]), 0.0)
    return h2 @ p["wt"] + p["bt"], h2 @ p["wm"] + p["bm"]


if __name__ == "__main__":
    key = jax.random.PRNGKey(0)
    k_param, k_x = jax.random.split(key)

    raw = init_raw_params(k_param)
    kparams = fold_params(raw)

    # Case 1: tiny batch -> single (ragged) grid block.
    # Case 2: batch spanning 2 grid steps with a ragged tail (max_block_b is
    #         clamped small so the multi-step path is exercised at demo size).
    for B, max_blk in ((8, MAX_BLOCK_B), (600, 512)):
        x = jax.random.normal(jax.random.fold_in(k_x, B), (B, D_IN), jnp.float32)

        temp, time = ann_forward(x, kparams, max_block_b=max_blk)
        jax.block_until_ready((temp, time))

        temp_ref, time_ref = reference_forward(x, raw)
        assert temp.shape == (B, D_TEMP) and time.shape == (B, D_TIME)
        assert jnp.allclose(temp, temp_ref, atol=1e-4, rtol=1e-4), ("temp mismatch", B)
        assert jnp.allclose(time, time_ref, atol=1e-4, rtol=1e-4), ("time mismatch", B)

    print("KERNEL_OK")
</pallas_src>

<mosaic_0001>
module attributes {stable_mosaic.version = 11 : i64} {
  func.func @_ann_kernel(%arg0: i32, %arg1: memref<256x6xf32, #tpu.memory_space<vmem>>, %arg2: memref<24x6xf32, #tpu.memory_space<vmem>>, %arg3: memref<24x1xf32, #tpu.memory_space<vmem>>, %arg4: memref<48x24xf32, #tpu.memory_space<vmem>>, %arg5: memref<48x1xf32, #tpu.memory_space<vmem>>, %arg6: memref<9x48xf32, #tpu.memory_space<vmem>>, %arg7: memref<9x1xf32, #tpu.memory_space<vmem>>, %arg8: memref<9x256xf32, #tpu.memory_space<vmem>>) attributes {dimension_semantics = [#tpu.dimension_semantics<parallel>], iteration_bounds = array<i64: 1>, scalar_prefetch = 0 : i64, scratch_operands = 0 : i64, tpu.core_type = #tpu.core_type<tc>, window_params = [{transform_indices = @transform_0, window_bounds = array<i64: 256, 6>}, {pipeline_mode = #tpu.pipeline_mode<synchronous>, transform_indices = @transform_1, window_bounds = array<i64: 24, 6>}, {pipeline_mode = #tpu.pipeline_mode<synchronous>, transform_indices = @transform_2, window_bounds = array<i64: 24, 1>}, {pipeline_mode = #tpu.pipeline_mode<synchronous>, transform_indices = @transform_3, window_bounds = array<i64: 48, 24>}, {pipeline_mode = #tpu.pipeline_mode<synchronous>, transform_indices = @transform_4, window_bounds = array<i64: 48, 1>}, {pipeline_mode = #tpu.pipeline_mode<synchronous>, transform_indices = @transform_5, window_bounds = array<i64: 9, 48>}, {pipeline_mode = #tpu.pipeline_mode<synchronous>, transform_indices = @transform_6, window_bounds = array<i64: 9, 1>}, {transform_indices = @transform_7, window_bounds = array<i64: 9, 256>}]} {
    %c0_i32 = arith.constant 0 : i32
    %c256_i32 = arith.constant 256 : i32
    %0 = arith.muli %c0_i32, %c256_i32 : i32
    %1 = tpu.assume_multiple %0, 256 : i32
    %2 = arith.index_cast %1 : i32 to index
    %c0 = arith.constant 0 : index
    %3 = vector.load %arg1[%2, %c0] : memref<256x6xf32, #tpu.memory_space<vmem>>, vector<256x6xf32>
    %c0_0 = arith.constant 0 : index
    %c0_1 = arith.constant 0 : index
    %4 = vector.load %arg2[%c0_0, %c0_1] : memref<24x6xf32, #tpu.memory_space<vmem>>, vector<24x6xf32>
    %cst = arith.constant dense<0.000000e+00> : vector<24x256xf32>
    %5 = tpu.matmul %4, %3, %cst {dimension_numbers = #tpu.dot_dimension_numbers<[1], [1], [0], [0], [0, 0, 1, 0], [], []>} : vector<24x6xf32>, vector<256x6xf32>, vector<24x256xf32> -> vector<24x256xf32>
    %c0_2 = arith.constant 0 : index
    %c0_3 = arith.constant 0 : index
    %6 = vector.load %arg3[%c0_2, %c0_3] : memref<24x1xf32, #tpu.memory_space<vmem>>, vector<24x1xf32>
    %7 = vector.broadcast %6 : vector<24x1xf32> to vector<24x256xf32>
    %8 = arith.addf %5, %7 : vector<24x256xf32>
    %cst_4 = arith.constant 0.000000e+00 : f32
    %9 = vector.broadcast %cst_4 : f32 to vector<24x256xf32>
    %10 = arith.maximumf %8, %9 : vector<24x256xf32>
    %c0_5 = arith.constant 0 : index
    %c0_6 = arith.constant 0 : index
    %11 = vector.load %arg4[%c0_5, %c0_6] : memref<48x24xf32, #tpu.memory_space<vmem>>, vector<48x24xf32>
    %cst_7 = arith.constant dense<0.000000e+00> : vector<48x256xf32>
    %12 = tpu.matmul %11, %10, %cst_7 {dimension_numbers = #tpu.dot_dimension_numbers<[1], [0], [0], [1], [0, 0, 1, 1], [], []>} : vector<48x24xf32>, vector<24x256xf32>, vector<48x256xf32> -> vector<48x256xf32>
    %c0_8 = arith.constant 0 : index
    %c0_9 = arith.constant 0 : index
    %13 = vector.load %arg5[%c0_8, %c0_9] : memref<48x1xf32, #tpu.memory_space<vmem>>, vector<48x1xf32>
    %14 = vector.broadcast %13 : vector<48x1xf32> to vector<48x256xf32>
    %15 = arith.addf %12, %14 : vector<48x256xf32>
    %cst_10 = arith.constant 0.000000e+00 : f32
    %16 = vector.broadcast %cst_10 : f32 to vector<48x256xf32>
    %17 = arith.maximumf %15, %16 : vector<48x256xf32>
    %c0_11 = arith.constant 0 : index
    %c0_12 = arith.constant 0 : index
    %18 = vector.load %arg6[%c0_11, %c0_12] : memref<9x48xf32, #tpu.memory_space<vmem>>, vector<9x48xf32>
    %cst_13 = arith.constant dense<0.000000e+00> : vector<9x256xf32>
    %19 = tpu.matmul %18, %17, %cst_13 {dimension_numbers = #tpu.dot_dimension_numbers<[1], [0], [0], [1], [0, 0, 1, 1], [], []>} : vector<9x48xf32>, vector<48x256xf32>, vector<9x256xf32> -> vector<9x256xf32>
    %c0_14 = arith.constant 0 : index
    %c0_15 = arith.constant 0 : index
    %20 = vector.load %arg7[%c0_14, %c0_15] : memref<9x1xf32, #tpu.memory_space<vmem>>, vector<9x1xf32>
    %21 = vector.broadcast %20 : vector<9x1xf32> to vector<9x256xf32>
    %22 = arith.addf %19, %21 : vector<9x256xf32>
    %c0_16 = arith.constant 0 : index
    %23 = arith.index_cast %1 : i32 to index
    %24 = vector.load %arg8[%c0_16, %23] : memref<9x256xf32, #tpu.memory_space<vmem>>, vector<9x256xf32>
    tpu.vector_store %arg8[%c0_16, %23], %22 {strides = array<i32>} : memref<9x256xf32, #tpu.memory_space<vmem>>, vector<9x256xf32>,
    %c1_i32 = arith.constant 1 : i32
    return
  }
  func.func @transform_0(%arg0: i32) -> (i32, i32) {
    %c0_i32 = arith.constant 0 : i32
    %c0_i32_0 = arith.constant 0 : i32
    return %arg0, %c0_i32 : i32, i32
  }
  func.func @transform_1(%arg0: i32) -> (i32, i32) {
    %c0_i32 = arith.constant 0 : i32
    %c0_i32_0 = arith.constant 0 : i32
    %c0_i32_1 = arith.constant 0 : i32
    return %c0_i32, %c0_i32_0 : i32, i32
  }
  func.func @transform_2(%arg0: i32) -> (i32, i32) {
    %c0_i32 = arith.constant 0 : i32
    %c0_i32_0 = arith.constant 0 : i32
    %c0_i32_1 = arith.constant 0 : i32
    return %c0_i32, %c0_i32_0 : i32, i32
  }
  func.func @transform_3(%arg0: i32) -> (i32, i32) {
    %c0_i32 = arith.constant 0 : i32
    %c0_i32_0 = arith.constant 0 : i32
    %c0_i32_1 = arith.constant 0 : i32
    return %c0_i32, %c0_i32_0 : i32, i32
  }
  func.func @transform_4(%arg0: i32) -> (i32, i32) {
    %c0_i32 = arith.constant 0 : i32
    %c0_i32_0 = arith.constant 0 : i32
    %c0_i32_1 = arith.constant 0 : i32
    return %c0_i32, %c0_i32_0 : i32, i32
  }
  func.func @transform_5(%arg0: i32) -> (i32, i32) {
    %c0_i32 = arith.constant 0 : i32
    %c0_i32_0 = arith.constant 0 : i32
    %c0_i32_1 = arith.constant 0 : i32
    return %c0_i32, %c0_i32_0 : i32, i32
  }
  func.func @transform_6(%arg0: i32) -> (i32, i32) {
    %c0_i32 = arith.constant 0 : i32
    %c0_i32_0 = arith.constant 0 : i32
    %c0_i32_1 = arith.constant 0 : i32
    return %c0_i32, %c0_i32_0 : i32, i32
  }
  func.func @transform_7(%arg0: i32) -> (i32, i32) {
    %c0_i32 = arith.constant 0 : i32
    %c0_i32_0 = arith.constant 0 : i32
    return %c0_i32, %arg0 : i32, i32
  }
}

</mosaic_0001>

<llo_original>
// kernel: ann_forward.1
$region0: #{ann_forward.1}
  #allocation0 [shape = 'u32[]', space=smem, size = 0x4, offset = 0x4, fixed_abs, tag = 'smem constant byte address 0x4 - core index']
  #allocation1 [shape = 'u32[144,128]{1,0:T(1,128)}', space=vmem, size = 0x12000, scoped, tag = 'internal scratch']
  %s0 = inlined_call_operand.vmem [shape: f32[8,6], index: 0, kind: input, shape index: {}]
  %s1 = inlined_call_operand.vmem [shape: f32[24,6], index: 1, kind: input, shape index: {}]
  %s2 = inlined_call_operand.vmem [shape: f32[24,1], index: 2, kind: input, shape index: {}]
  %s3 = inlined_call_operand.vmem [shape: f32[48,24], index: 3, kind: input, shape index: {}]
  %s4 = inlined_call_operand.vmem [shape: f32[48,1], index: 4, kind: input, shape index: {}]
  %s5 = inlined_call_operand.vmem [shape: f32[9,48], index: 5, kind: input, shape index: {}]
  %s6 = inlined_call_operand.vmem [shape: f32[9,1], index: 6, kind: input, shape index: {}]
  %s7 = inlined_call_operand.vmem [shape: f32[9,8], index: 7, kind: output, shape index: {}]
  %s8 = sld [smem:[#allocation0]]
  $region72: #{ann_forward.1} parent=0
    _
  %s10 = ssub.s32 1, %s8
  %s11 = scalar_select 0, %s10, %s8
  $region1: #{ann_forward.1} parent=0
    #allocation2 [shape = 'u8[16384]{0}', space=vmem, size = 0x4000, scoped, tag = 'output window, operand 0, single buffered']
    // Predicated region
    $region2: #{ann_forward.1} parent=1 // pred_check
      _
    $region3: #{ann_forward.1} parent=1 // pred_check_branch
      %13 = sbr.rel (0) target = $region5
    $region4: #{ann_forward.1} parent=1 // pred_region
      _
    $region5: #{ann_forward.1} parent=1 // pred_fallthru
      _
    // Predicated region
    $region6: #{ann_forward.1} parent=1 // pred_check
      _
    $region7: #{ann_forward.1} parent=1 // pred_check_branch
      %15 = sbr.rel (0) target = $region9
    $region8: #{ann_forward.1} parent=1 // pred_region
      _
    $region9: #{ann_forward.1} parent=1 // pred_fallthru
      _
    // Predicated region
    $region10: #{ann_forward.1} parent=1 // pred_check
      _
    $region11: #{ann_forward.1} parent=1 // pred_check_branch
      %17 = sbr.rel (0) target = $region13
    $region12: #{ann_forward.1} parent=1 // pred_region
      _
    $region13: #{ann_forward.1} parent=1 // pred_fallthru
      _
    // Predicated region
    $region14: #{ann_forward.1} parent=1 // pred_check
      _
    $region15: #{ann_forward.1} parent=1 // pred_check_branch
      %19 = sbr.rel (0) target = $region17
    $region16: #{ann_forward.1} parent=1 // pred_region
      _
    $region17: #{ann_forward.1} parent=1 // pred_fallthru
      _
    // Predicated region
    $region18: #{ann_forward.1} parent=1 // pred_check
      _
    $region19: #{ann_forward.1} parent=1 // pred_check_branch
      %21 = sbr.rel (0) target = $region21
    $region20: #{ann_forward.1} parent=1 // pred_region
      _
    $region21: #{ann_forward.1} parent=1 // pred_fallthru
      _
    // Predicated region
    $region22: #{ann_forward.1} parent=1 // pred_check
      _
    $region23: #{ann_forward.1} parent=1 // pred_check_branch
      %23 = sbr.rel (0) target = $region25
    $region24: #{ann_forward.1} parent=1 // pred_region
      _
    $region25: #{ann_forward.1} parent=1 // pred_fallthru
      _
    // Predicated region
    $region26: #{ann_forward.1} parent=1 // pred_check
      _
    $region27: #{ann_forward.1} parent=1 // pred_check_branch
      %25 = sbr.rel (0) target = $region29
    $region28: #{ann_forward.1} parent=1 // pred_region
      _
    $region29: #{ann_forward.1} parent=1 // pred_fallthru
      _
    %v26 = vld [vmem:[%s0] sm:$0xff]
    %v27 = vld [vmem:[%s0 + $0x8] sm:$0xff]
    %v28 = vld [vmem:[%s0 + $0x10] sm:$0xff]
    %v29 = vld [vmem:[%s0 + $0x18] sm:$0xff]
    %v30 = vld [vmem:[%s0 + $0x20] sm:$0xff]
    %v31 = vld [vmem:[%s0 + $0x28] sm:$0xff]
    %v32 = vld [vmem:[%s0 + $0x30] sm:$0xff]
    %v33 = vld [vmem:[%s0 + $0x38] sm:$0xff]
    %v34 = vld [vmem:[%s0 + $0x40] sm:$0xff]
    %v35 = vld [vmem:[%s0 + $0x48] sm:$0xff]
    %v36 = vld [vmem:[%s0 + $0x50] sm:$0xff]
    %v37 = vld [vmem:[%s0 + $0x58] sm:$0xff]
    %v38 = vld [vmem:[%s0 + $0x60] sm:$0xff]
    %v39 = vld [vmem:[%s0 + $0x68] sm:$0xff]
    %v40 = vld [vmem:[%s0 + $0x70] sm:$0xff]
    %v41 = vld [vmem:[%s0 + $0x78] sm:$0xff]
    %v42 = vld [vmem:[%s0 + $0x80] sm:$0xff]
    %v43 = vld [vmem:[%s0 + $0x88] sm:$0xff]
    %v44 = vld [vmem:[%s0 + $0x90] sm:$0xff]
    %v45 = vld [vmem:[%s0 + $0x98] sm:$0xff]
    %v46 = vld [vmem:[%s0 + $0xa0] sm:$0xff]
    %v47 = vld [vmem:[%s0 + $0xa8] sm:$0xff]
    %v48 = vld [vmem:[%s0 + $0xb0] sm:$0xff]
    %v49 = vld [vmem:[%s0 + $0xb8] sm:$0xff]
    %v50 = vld [vmem:[%s0 + $0xc0] sm:$0xff]
    %v51 = vld [vmem:[%s0 + $0xc8] sm:$0xff]
    %v52 = vld [vmem:[%s0 + $0xd0] sm:$0xff]
    %v53 = vld [vmem:[%s0 + $0xd8] sm:$0xff]
    %v54 = vld [vmem:[%s0 + $0xe0] sm:$0xff]
    %v55 = vld [vmem:[%s0 + $0xe8] sm:$0xff]
    %v56 = vld [vmem:[%s0 + $0xf0] sm:$0xff]
    %v57 = vld [vmem:[%s0 + $0xf8] sm:$0xff]
    %v58 = vld [vmem:[%s1] sm:$0xff]
    %v59 = vld [vmem:[%s1 + $0x8] sm:$0xff]
    %v60 = vld [vmem:[%s1 + $0x10] sm:$0xff]
    %v61 = vld [vmem:[%s2] sm:$0xff]
    %v62 = vld [vmem:[%s2 + $0x8] sm:$0xff]
    %v63 = vld [vmem:[%s2 + $0x10] sm:$0xff]
    %65 = vset.pattern.permute.xlu0 0
    %66 = vperm.xlu0 %65, %v61
    %v67 = vpop.permute.xlu0 %66
    %70 = vset.pattern.permute.xlu0 0
    %71 = vperm.xlu0 %70, %v62
    %v72 = vpop.permute.xlu0 %71
    %75 = vset.pattern.permute.xlu0 0
    %76 = vperm.xlu0 %75, %v63
    %v77 = vpop.permute.xlu0 %76
    %vm79 = vcmask 48128
    %v81 = vsel %vm79, %v58, 0
    %v84 = vsel %vm79, %v59, 0
    %v87 = vsel %vm79, %v60, 0
    %v90 = vsel %vm79, %v26, 0
    %v93 = vsel %vm79, %v27, 0
    %v96 = vsel %vm79, %v28, 0
    %v99 = vsel %vm79, %v29, 0
    %v102 = vsel %vm79, %v30, 0
    %v105 = vsel %vm79, %v31, 0
    %v108 = vsel %vm79, %v32, 0
    %v111 = vsel %vm79, %v33, 0
    %v114 = vsel %vm79, %v34, 0
    %v117 = vsel %vm79, %v35, 0
    %v120 = vsel %vm79, %v36, 0
    %v123 = vsel %vm79, %v37, 0
    %v126 = vsel %vm79, %v38, 0
    %v129 = vsel %vm79, %v39, 0
    %v132 = vsel %vm79, %v40, 0
    %v135 = vsel %vm79, %v41, 0
    %v138 = vsel %vm79, %v42, 0
    %v141 = vsel %vm79, %v43, 0
    %v144 = vsel %vm79, %v44, 0
    %v147 = vsel %vm79, %v45, 0
    %v150 = vsel %vm79, %v46, 0
    %v153 = vsel %vm79, %v47, 0
    %v156 = vsel %vm79, %v48, 0
    %v159 = vsel %vm79, %v49, 0
    %v162 = vsel %vm79, %v50, 0
    %v165 = vsel %vm79, %v51, 0
    %v168 = vsel %vm79, %v52, 0
    %v171 = vsel %vm79, %v53, 0
    %v174 = vsel %vm79, %v54, 0
    %v177 = vsel %vm79, %v55, 0
    %v180 = vsel %vm79, %v56, 0
    %v183 = vsel %vm79, %v57, 0
    %185 = vmatprep.subr.mxu0 0.0
    %186 = vmatpush1.xpose.msra.mxu0 %v90
    %187 = vmatprep.subr.mxu0 0.0
    %188 = vmatpush1.xpose.msra.mxu0 %v93
    %189 = vmatprep.subr.mxu0 0.0
    %190 = vmatpush1.xpose.msra.mxu0 %v96
    %191 = vmatprep.subr.mxu0 0.0
    %192 = vmatpush1.xpose.msra.mxu0 %v99
    %193 = vmatprep.subr.mxu0 0.0
    %194 = vmatpush1.xpose.msra.mxu0 %v102
    %195 = vmatprep.subr.mxu0 0.0
    %196 = vmatpush1.xpose.msra.mxu0 %v105
    %197 = vmatprep.subr.mxu0 0.0
    %198 = vmatpush1.xpose.msra.mxu0 %v108
    %199 = vmatprep.subr.mxu0 0.0
    %200 = vmatpush1.xpose.msra.mxu0 %v111
    %201 = vmatprep.subr.mxu0 0.0
    %202 = vmatpush1.xpose.msra.mxu0 %v114
    %203 = vmatprep.subr.mxu0 0.0
    %204 = vmatpush1.xpose.msra.mxu0 %v117
    %205 = vmatprep.subr.mxu0 0.0
    %206 = vmatpush1.xpose.msra.mxu0 %v120
    %207 = vmatprep.subr.mxu0 0.0
    %208 = vmatpush1.xpose.msra.mxu0 %v123
    %209 = vmatprep.subr.mxu0 0.0
    %210 = vmatpush1.xpose.msra.mxu0 %v126
    %211 = vmatprep.subr.mxu0 0.0
    %212 = vmatpush1.xpose.msra.mxu0 %v129
    %213 = vmatprep.subr.mxu0 0.0
    %214 = vmatpush1.xpose.msra.mxu0 %v132
    %215 = vmatprep.subr.mxu0 0.0
    %216 = vmatpush1.xpose.msra.mxu0 %v135
    %217 = vmatprep.subr.mxu0 0.0
    %218 = vmatpush1.xpose.msra.mxu0 %v138
    %219 = vmatprep.subr.mxu0 0.0
    %220 = vmatpush1.xpose.msra.mxu0 %v141
    %221 = vmatprep.subr.mxu0 0.0
    %222 = vmatpush1.xpose.msra.mxu0 %v144
    %223 = vmatprep.subr.mxu0 0.0
    %224 = vmatpush1.xpose.msra.mxu0 %v147
    %225 = vmatprep.subr.mxu0 0.0
    %226 = vmatpush1.xpose.msra.mxu0 %v150
    %227 = vmatprep.subr.mxu0 0.0
    %228 = vmatpush1.xpose.msra.mxu0 %v153
    %229 = vmatprep.subr.mxu0 0.0
    %230 = vmatpush1.xpose.msra.mxu0 %v156
    %231 = vmatprep.subr.mxu0 0.0
    %232 = vmatpush1.xpose.msra.mxu0 %v159
    %233 = vmatprep.subr.mxu0 0.0
    %234 = vmatpush1.xpose.msra.mxu0 %v162
    %235 = vmatprep.subr.mxu0 0.0
    %236 = vmatpush1.xpose.msra.mxu0 %v165
    %237 = vmatprep.subr.mxu0 0.0
    %238 = vmatpush1.xpose.msra.mxu0 %v168
    %239 = vmatprep.subr.mxu0 0.0
    %240 = vmatpush1.xpose.msra.mxu0 %v171
    %241 = vmatprep.subr.mxu0 0.0
    %242 = vmatpush1.xpose.msra.mxu0 %v174
    %243 = vmatprep.subr.mxu0 0.0
    %244 = vmatpush1.xpose.msra.mxu0 %v177
    %245 = vmatprep.subr.mxu0 0.0
    %246 = vmatpush1.xpose.msra.mxu0 %v180
    %247 = vmatprep.subr.mxu0 0.0
    %248 = vmatpush1.xpose.msra.mxu0 %v183
    %249 = vmatprep.mubr.f32.mxu0 0.0
    %250 = vmatmul.mubr.f32.gmra.mrb[0].mxu0 %v81
    %v251 = vpop.f32.mrb[0].mxu0
    %v252 = vadd.f32 %v67, %v251
    %v253 = vpop.f32.mrb[0].mxu0
    %v254 = vadd.f32 %v67, %v253
    %255 = vmatprep.mubr.f32.mxu0 0.0
    %256 = vmatmul.mubr.f32.gmra.mrb[0].mxu0 %v84
    %v257 = vpop.f32.mrb[0].mxu0
    %v258 = vadd.f32 %v72, %v257
    %v259 = vpop.f32.mrb[0].mxu0
    %v260 = vadd.f32 %v72, %v259
    %261 = vmatprep.mubr.f32.mxu0 0.0
    %262 = vmatmul.mubr.f32.gmra.mrb[0].mxu0 %v87
    %v263 = vpop.f32.mrb[0].mxu0
    %v264 = vadd.f32 %v77, %v263
    %v265 = vpop.f32.mrb[0].mxu0
    %v266 = vadd.f32 %v77, %v265
    %267 = vdwg.mxu0
    %v268 = vmax.f32 %v252, 0.0
    %v269 = vmax.f32 %v254, 0.0
    %v270 = vmax.f32 %v258, 0.0
    %v271 = vmax.f32 %v260, 0.0
    %v272 = vmax.f32 %v264, 0.0
    %v273 = vmax.f32 %v266, 0.0
    %v274 = vld [vmem:[%s3] sm:$0xff]
    %v275 = vld [vmem:[%s3 + $0x8] sm:$0xff]
    %v276 = vld [vmem:[%s3 + $0x10] sm:$0xff]
    %v277 = vld [vmem:[%s3 + $0x18] sm:$0xff]
    %v278 = vld [vmem:[%s3 + $0x20] sm:$0xff]
    %v279 = vld [vmem:[%s3 + $0x28] sm:$0xff]
    %v280 = vld [vmem:[%s4] sm:$0xff]
    %v281 = vld [vmem:[%s4 + $0x8] sm:$0xff]
    %v282 = vld [vmem:[%s4 + $0x10] sm:$0xff]
    %v283 = vld [vmem:[%s4 + $0x18] sm:$0xff]
    %v284 = vld [vmem:[%s4 + $0x20] sm:$0xff]
    %v285 = vld [vmem:[%s4 + $0x28] sm:$0xff]
    %287 = vset.pattern.permute.xlu0 0
    %288 = vperm.xlu0 %287, %v280
    %v289 = vpop.permute.xlu0 %288
    %292 = vset.pattern.permute.xlu0 0
    %293 = vperm.xlu0 %292, %v281
    %v294 = vpop.permute.xlu0 %293
    %297 = vset.pattern.permute.xlu0 0
    %298 = vperm.xlu0 %297, %v282
    %v299 = vpop.permute.xlu0 %298
    %302 = vset.pattern.permute.xlu0 0
    %303 = vperm.xlu0 %302, %v283
    %v304 = vpop.permute.xlu0 %303
    %307 = vset.pattern.permute.xlu0 0
    %308 = vperm.xlu0 %307, %v284
    %v309 = vpop.permute.xlu0 %308
    %312 = vset.pattern.permute.xlu0 0
    %313 = vperm.xlu0 %312, %v285
    %v314 = vpop.permute.xlu0 %313
    %vm316 = vcmask 195584
    %v318 = vsel %vm316, %v274, 0
    %v321 = vsel %vm316, %v275, 0
    %v324 = vsel %vm316, %v276, 0
    %v327 = vsel %vm316, %v277, 0
    %v330 = vsel %vm316, %v278, 0
    %v333 = vsel %vm316, %v279, 0
    %335 = vmatprep.subr.mxu0 %v269
    %336 = vmatpush1.msra.mxu0 %v268
    %337 = vmatprep.subr.mxu0 %v271
    %338 = vmatpush1.msra.mxu0 %v270
    %339 = vmatprep.subr.mxu0 %v273
    %340 = vmatpush1.msra.mxu0 %v272
    %341 = vmatprep.subr.mxu0 0.0
    %342 = vmatpush1.msra.mxu0 0.0
    %343 = vmatprep.subr.mxu0 0.0
    %344 = vmatpush1.msra.mxu0 0.0
    %345 = vmatprep.subr.mxu0 0.0
    %346 = vmatpush1.msra.mxu0 0.0
    %347 = vmatprep.subr.mxu0 0.0
    %348 = vmatpush1.msra.mxu0 0.0
    %349 = vmatprep.subr.mxu0 0.0
    %350 = vmatpush1.msra.mxu0 0.0
    %351 = vmatprep.subr.mxu0 0.0
    %352 = vmatpush1.msra.mxu0 0.0
    %353 = vmatprep.subr.mxu0 0.0
    %354 = vmatpush1.msra.mxu0 0.0
    %355 = vmatprep.subr.mxu0 0.0
    %356 = vmatpush1.msra.mxu0 0.0
    %357 = vmatprep.subr.mxu0 0.0
    %358 = vmatpush1.msra.mxu0 0.0
    %359 = vmatprep.subr.mxu0 0.0
    %360 = vmatpush1.msra.mxu0 0.0
    %361 = vmatprep.subr.mxu0 0.0
    %362 = vmatpush1.msra.mxu0 0.0
    %363 = vmatprep.subr.mxu0 0.0
    %364 = vmatpush1.msra.mxu0 0.0
    %365 = vmatprep.subr.mxu0 0.0
    %366 = vmatpush1.msra.mxu0 0.0
    %367 = vmatprep.subr.mxu0 0.0
    %368 = vmatpush1.msra.mxu0 0.0
    %369 = vmatprep.subr.mxu0 0.0
    %370 = vmatpush1.msra.mxu0 0.0
    %371 = vmatprep.subr.mxu0 0.0
    %372 = vmatpush1.msra.mxu0 0.0
    %373 = vmatprep.subr.mxu0 0.0
    %374 = vmatpush1.msra.mxu0 0.0
    %375 = vmatprep.subr.mxu0 0.0
    %376 = vmatpush1.msra.mxu0 0.0
    %377 = vmatprep.subr.mxu0 0.0
    %378 = vmatpush1.msra.mxu0 0.0
    %379 = vmatprep.subr.mxu0 0.0
    %380 = vmatpush1.msra.mxu0 0.0
    %381 = vmatprep.subr.mxu0 0.0
    %382 = vmatpush1.msra.mxu0 0.0
    %383 = vmatprep.subr.mxu0 0.0
    %384 = vmatpush1.msra.mxu0 0.0
    %385 = vmatprep.subr.mxu0 0.0
    %386 = vmatpush1.msra.mxu0 0.0
    %387 = vmatprep.subr.mxu0 0.0
    %388 = vmatpush1.msra.mxu0 0.0
    %389 = vmatprep.subr.mxu0 0.0
    %390 = vmatpush1.msra.mxu0 0.0
    %391 = vmatprep.subr.mxu0 0.0
    %392 = vmatpush1.msra.mxu0 0.0
    %393 = vmatprep.subr.mxu0 0.0
    %394 = vmatpush1.msra.mxu0 0.0
    %395 = vmatprep.subr.mxu0 0.0
    %396 = vmatpush1.msra.mxu0 0.0
    %397 = vmatprep.subr.mxu0 0.0
    %398 = vmatpush1.msra.mxu0 0.0
    %399 = vmatprep.mubr.f32.mxu0 0.0
    %400 = vmatmul.mubr.f32.gmra.mrb[0].mxu0 %v318
    %v401 = vpop.f32.mrb[0].mxu0
    %v402 = vadd.f32 %v289, %v401
    %v403 = vpop.f32.mrb[0].mxu0
    %v404 = vadd.f32 %v289, %v403
    %405 = vmatprep.mubr.f32.mxu0 0.0
    %406 = vmatmul.mubr.f32.gmra.mrb[0].mxu0 %v321
    %v407 = vpop.f32.mrb[0].mxu0
    %v408 = vadd.f32 %v294, %v407
    %v409 = vpop.f32.mrb[0].mxu0
    %v410 = vadd.f32 %v294, %v409
    %411 = vmatprep.mubr.f32.mxu0 0.0
    %412 = vmatmul.mubr.f32.gmra.mrb[0].mxu0 %v324
    %v413 = vpop.f32.mrb[0].mxu0
    %v414 = vadd.f32 %v299, %v413
    %v415 = vpop.f32.mrb[0].mxu0
    %v416 = vadd.f32 %v299, %v415
    %417 = vmatprep.mubr.f32.mxu0 0.0
    %418 = vmatmul.mubr.f32.gmra.mrb[0].mxu0 %v327
    %v419 = vpop.f32.mrb[0].mxu0
    %v420 = vadd.f32 %v304, %v419
    %v421 = vpop.f32.mrb[0].mxu0
    %v422 = vadd.f32 %v304, %v421
    %423 = vmatprep.mubr.f32.mxu0 0.0
    %424 = vmatmul.mubr.f32.gmra.mrb[0].mxu0 %v330
    %v425 = vpop.f32.mrb[0].mxu0
    %v426 = vadd.f32 %v309, %v425
    %v427 = vpop.f32.mrb[0].mxu0
    %v428 = vadd.f32 %v309, %v427
    %429 = vmatprep.mubr.f32.mxu0 0.0
    %430 = vmatmul.mubr.f32.gmra.mrb[0].mxu0 %v333
    %v431 = vpop.f32.mrb[0].mxu0
    %v432 = vadd.f32 %v314, %v431
    %v433 = vpop.f32.mrb[0].mxu0
    %v434 = vadd.f32 %v314, %v433
    %435 = vdwg.mxu0
    %v436 = vmax.f32 %v402, 0.0
    %v437 = vmax.f32 %v404, 0.0
    %v438 = vmax.f32 %v408, 0.0
    %v439 = vmax.f32 %v410, 0.0
    %v440 = vmax.f32 %v414, 0.0
    %v441 = vmax.f32 %v416, 0.0
    %v442 = vmax.f32 %v420, 0.0
    %v443 = vmax.f32 %v422, 0.0
    %v444 = vmax.f32 %v426, 0.0
    %v445 = vmax.f32 %v428, 0.0
    %v446 = vmax.f32 %v432, 0.0
    %v447 = vmax.f32 %v434, 0.0
    %v448 = vld [vmem:[%s5] sm:$0xff]
    %v449 = vld [vmem:[%s5 + $0x8] sm:$0x1]
    %v450 = vld [vmem:[%s6] sm:$0xff]
    %v451 = vld [vmem:[%s6 + $0x8] sm:$0x1]
    %453 = vset.pattern.permute.xlu0 0
    %454 = vperm.xlu0 %453, %v450
    %v455 = vpop.permute.xlu0 %454
    %458 = vset.pattern.permute.xlu0 0
    %459 = vperm.xlu0 %458, %v451
    %v460 = vpop.permute.xlu0 %459
    %vm462 = vcmask 392192
    %v464 = vsel %vm462, %v448, 0
    %v467 = vsel %vm462, %v449, 0
    %469 = vmatprep.subr.mxu0 %v437
    %470 = vmatpush1.msra.mxu0 %v436
    %471 = vmatprep.subr.mxu0 %v439
    %472 = vmatpush1.msra.mxu0 %v438
    %473 = vmatprep.subr.mxu0 %v441
    %474 = vmatpush1.msra.mxu0 %v440
    %475 = vmatprep.subr.mxu0 %v443
    %476 = vmatpush1.msra.mxu0 %v442
    %477 = vmatprep.subr.mxu0 %v445
    %478 = vmatpush1.msra.mxu0 %v444
    %479 = vmatprep.subr.mxu0 %v447
    %480 = vmatpush1.msra.mxu0 %v446
    %481 = vmatprep.subr.mxu0 0.0
    %482 = vmatpush1.msra.mxu0 0.0
    %483 = vmatprep.subr.mxu0 0.0
    %484 = vmatpush1.msra.mxu0 0.0
    %485 = vmatprep.subr.mxu0 0.0
    %486 = vmatpush1.msra.mxu0 0.0
    %487 = vmatprep.subr.mxu0 0.0
    %488 = vmatpush1.msra.mxu0 0.0
    %489 = vmatprep.subr.mxu0 0.0
    %490 = vmatpush1.msra.mxu0 0.0
    %491 = vmatprep.subr.mxu0 0.0
    %492 = vmatpush1.msra.mxu0 0.0
    %493 = vmatprep.subr.mxu0 0.0
    %494 = vmatpush1.msra.mxu0 0.0
    %495 = vmatprep.subr.mxu0 0.0
    %496 = vmatpush1.msra.mxu0 0.0
    %497 = vmatprep.subr.mxu0 0.0
    %498 = vmatpush1.msra.mxu0 0.0
    %499 = vmatprep.subr.mxu0 0.0
    %500 = vmatpush1.msra.mxu0 0.0
    %501 = vmatprep.subr.mxu0 0.0
    %502 = vmatpush1.msra.mxu0 0.0
    %503 = vmatprep.subr.mxu0 0.0
    %504 = vmatpush1.msra.mxu0 0.0
    %505 = vmatprep.subr.mxu0 0.0
    %506 = vmatpush1.msra.mxu0 0.0
    %507 = vmatprep.subr.mxu0 0.0
    %508 = vmatpush1.msra.mxu0 0.0
    %509 = vmatprep.subr.mxu0 0.0
    %510 = vmatpush1.msra.mxu0 0.0
    %511 = vmatprep.subr.mxu0 0.0
    %512 = vmatpush1.msra.mxu0 0.0
    %513 = vmatprep.subr.mxu0 0.0
    %514 = vmatpush1.msra.mxu0 0.0
    %515 = vmatprep.subr.mxu0 0.0
    %516 = vmatpush1.msra.mxu0 0.0
    %517 = vmatprep.subr.mxu0 0.0
    %518 = vmatpush1.msra.mxu0 0.0
    %519 = vmatprep.subr.mxu0 0.0
    %520 = vmatpush1.msra.mxu0 0.0
    %521 = vmatprep.subr.mxu0 0.0
    %522 = vmatpush1.msra.mxu0 0.0
    %523 = vmatprep.subr.mxu0 0.0
    %524 = vmatpush1.msra.mxu0 0.0
    %525 = vmatprep.subr.mxu0 0.0
    %526 = vmatpush1.msra.mxu0 0.0
    %527 = vmatprep.subr.mxu0 0.0
    %528 = vmatpush1.msra.mxu0 0.0
    %529 = vmatprep.subr.mxu0 0.0
    %530 = vmatpush1.msra.mxu0 0.0
    %531 = vmatprep.subr.mxu0 0.0
    %532 = vmatpush1.msra.mxu0 0.0
    %533 = vmatprep.mubr.f32.mxu0 0.0
    %534 = vmatmul.mubr.f32.gmra.mrb[0].mxu0 %v464
    %v535 = vpop.f32.mrb[0].mxu0
    %v536 = vadd.f32 %v455, %v535
    %v537 = vpop.f32.mrb[0].mxu0
    %v538 = vadd.f32 %v455, %v537
    %539 = vmatprep.mubr.f32.mxu0 0.0
    %540 = vmatmul.mubr.f32.gmra.mrb[0].mxu0 %v467
    %v541 = vpop.f32.mrb[0].mxu0
    %v542 = vadd.f32 %v460, %v541
    %v543 = vpop.f32.mrb[0].mxu0
    %v544 = vadd.f32 %v460, %v543
    %545 = vdwg.mxu0
    %546 = vst [vmem:[#allocation2] sm:$0xff] %v536
    %547 = vst [vmem:[#allocation2 + $0x8] sm:$0xff] %v538
    %548 = vst [vmem:[#allocation2 + $0x10] sm:$0x1] %v542
    %549 = vst [vmem:[#allocation2 + $0x18] sm:$0x1] %v544
    // Predicated region
    $region30: #{ann_forward.1} parent=1 // pred_check
      _
    $region31: #{ann_forward.1} parent=1 // pred_check_branch
      %551 = sbr.rel (0) target = $region33
    $region32: #{ann_forward.1} parent=1 // pred_region
      // Predicated region
      $region34: #{ann_forward.1} parent=32 // pred_check
        _
      $region35: #{ann_forward.1} parent=32 // pred_check_branch
        %553 = sbr.rel (0) target = $region37
      $region36: #{ann_forward.1} parent=32 // pred_region
        // Predicated region
        $region38: #{ann_forward.1} parent=36 // pred_check
          _
        $region39: #{ann_forward.1} parent=36 // pred_check_branch
          %555 = sbr.rel (0) target = $region41
        $region40: #{ann_forward.1} parent=36 // pred_region
          // Predicated region
          $region53: #{ann_forward.1} parent=40 // pred_check
            _
          $region54: #{ann_forward.1} parent=40 // pred_check_branch
            %572 = sbr.rel (0) target = $region56
          $region55: #{ann_forward.1} parent=40 // pred_region
            loop: start=0, step=1, limit=1
            $region57: #{ann_forward.1} parent=55 // loop_pre_header
              _
            $region58: #{ann_forward.1} parent=55 // loop_header
              %s574 = sphi 0, %s578
              %p575 = scmp.ge.s32.totalorder %s574, 1
              %s579 = sphi [#allocation2], [#allocation2]
              %s580 = sphi %s7, %s7
            $region59: #{ann_forward.1} parent=55 // loop_header_branch
              %577 = sbr.rel (%p575) target = $region63
            $region60: #{ann_forward.1} parent=55 // loop_body
              %v581 = vld [vmem:[%s579] sm:$0xff]
              %582 = vst [vmem:[%s580] sm:$0xff] %v581
              %v583 = vld [vmem:[%s579 + $0x10] sm:$0xff]
              %584 = vst [vmem:[%s580 + $0x8] sm:$0xff] %v583
            $region61: #{ann_forward.1} parent=55 // loop_footer
              %s578 = sadd.s32 1, %s574
            $region62: #{ann_forward.1} parent=55 // loop_footer_branch
              %573 = sbr.rel target = $region58
            $region63: #{ann_forward.1} parent=55 // loop_exit
              _
          $region56: #{ann_forward.1} parent=40 // pred_fallthru
            _
          // Predicated region
          $region64: #{ann_forward.1} parent=40 // pred_check
            _
          $region65: #{ann_forward.1} parent=40 // pred_check_branch
            %586 = sbr.rel target = $region67
          $region66: #{ann_forward.1} parent=40 // pred_region
            _
          $region67: #{ann_forward.1} parent=40 // pred_fallthru
            _
        $region41: #{ann_forward.1} parent=36 // pred_fallthru
          _
        // Predicated region
        $region42: #{ann_forward.1} parent=36 // pred_check
          _
        $region43: #{ann_forward.1} parent=36 // pred_check_branch
          %557 = sbr.rel target = $region45
        $region44: #{ann_forward.1} parent=36 // pred_region
          loop: start=0, step=1, limit=1
          $region46: #{ann_forward.1} parent=44 // loop_pre_header
            _
          $region47: #{ann_forward.1} parent=44 // loop_header
            %s560 = sphi 0, %s564
            %p561 = scmp.ge.s32.totalorder %s560, 1
            %s565 = sphi [#allocation2], [#allocation2]
            %s566 = sphi %s7, %s7
          $region48: #{ann_forward.1} parent=44 // loop_header_branch
            %563 = sbr.rel (%p561) target = $region52
          $region49: #{ann_forward.1} parent=44 // loop_body
            %v567 = vld [vmem:[%s565] sm:$0xff]
            %568 = vst [vmem:[%s566] sm:$0xff] %v567
            %v569 = vld [vmem:[%s565 + $0x10] sm:$0xff]
            %570 = vst [vmem:[%s566 + $0x8] sm:$0xff] %v569
          $region50: #{ann_forward.1} parent=44 // loop_footer
            %s564 = sadd.s32 1, %s560
          $region51: #{ann_forward.1} parent=44 // loop_footer_branch
            %559 = sbr.rel target = $region47
          $region52: #{ann_forward.1} parent=44 // loop_exit
            _
        $region45: #{ann_forward.1} parent=36 // pred_fallthru
          _
      $region37: #{ann_forward.1} parent=32 // pred_fallthru
        _
      %587 = vnop
    $region33: #{ann_forward.1} parent=1 // pred_fallthru
      _
    // Predicated region
    $region68: #{ann_forward.1} parent=1 // pred_check
      _
    $region69: #{ann_forward.1} parent=1 // pred_check_branch
      %589 = sbr.rel (0) target = $region71
    $region70: #{ann_forward.1} parent=1 // pred_region
      _
    $region71: #{ann_forward.1} parent=1 // pred_fallthru
      _

</llo_original>
